<compile_context>
chip_gen: v7x
topology: tpu7x:2x2x1
jax: 0.10.0
libtpu: 0.0.40
codegen_flags: <defaults>
</compile_context>

<pallas_src>
import functools
import math

import jax
import jax.numpy as jnp
from jax.experimental import pallas as pl
from jax.experimental.pallas import tpu as pltpu


def _patch_embed_kernel(x_ref, w_ref, b_ref, o_ref):
    # x_ref: (B, P*K)    bf16, flattened patches, patch-major columns
    # w_ref: (P*K, P*D)  bf16, block-diagonal per-patch projections
    # b_ref: (1, P*D)    f32, per-patch biases flattened to the output slab
    # o_ref: (B, P*D)    f32, lane-dense output slab (last dim multiple of 128)
    y = jnp.dot(x_ref[...], w_ref[...], preferred_element_type=jnp.float32)
    o_ref[...] = (y + b_ref[...]).astype(o_ref.dtype)   # single unmasked store


def patch_embedding_pallas(x, weights, biases, patch_size):
    """x: (B, C, H, W) f32. weights: (n_patches, K, d_dim). biases: (n_patches, d_dim)."""
    B, C, H, W = x.shape
    p = patch_size
    assert H % p == 0 and W % p == 0, "image size must be divisible by patch size"
    row, col = H // p, W // p
    n_patches = row * col
    K = C * p * p
    d_dim = weights.shape[-1]
    assert weights.shape == (n_patches, K, d_dim)
    assert biases.shape == (n_patches, d_dim)
    # Lane-density assumptions (avoid masked vst / relayouts for other configs).
    assert K % 128 == 0, "K = C*p*p must be a multiple of 128"
    assert (n_patches * d_dim) % 128 == 0, "n_patches*d_dim must be a multiple of 128"

    # Patch crop + flatten exactly like crop_img + nn.Flatten (C, ph, pw order),
    # laid out patch-major along the last (lane) axis:
    # (B, C, row, p, col, p) -> (B, row, col, C, p, p) -> (B, n_patches*K)
    xp = x.reshape(B, C, row, p, col, p)
    xp = jnp.transpose(xp, (0, 2, 4, 1, 3, 5)).reshape(B, n_patches * K)

    # Block-diagonal lane-dense weight: (P*K, P*D), block i = weights[i] (K x D).
    w_bd = jnp.zeros((n_patches * K, n_patches * d_dim), weights.dtype)
    for i in range(n_patches):  # static, small P
        w_bd = w_bd.at[i * K:(i + 1) * K, i * d_dim:(i + 1) * d_dim].set(weights[i])

    b_flat = biases.reshape(1, n_patches * d_dim).astype(jnp.float32)

    # bf16 operands for the MXU; f32 accumulation inside the kernel.
    xp_bf = xp.astype(jnp.bfloat16)
    w_bf = w_bd.astype(jnp.bfloat16)

    # Single invocation (no grid): everything lives in VMEM for the whole call.
    out = pl.pallas_call(
        _patch_embed_kernel,
        out_shape=jax.ShapeDtypeStruct((B, n_patches * d_dim), jnp.float32),
        in_specs=[
            pl.BlockSpec(memory_space=pltpu.MemorySpace.VMEM),
            pl.BlockSpec(memory_space=pltpu.MemorySpace.VMEM),
            pl.BlockSpec(memory_space=pltpu.MemorySpace.VMEM),
        ],
        out_specs=pl.BlockSpec(memory_space=pltpu.MemorySpace.VMEM),
    )(xp_bf, w_bf, b_flat)

    # (B, n_patches*d_dim) -> (B, n_patches, d_dim): free (contiguous) reshape.
    return out.reshape(B, n_patches, d_dim).astype(x.dtype)


def _reference(x, weights, biases, patch_size):
    """Pure-JAX f32 reference mirroring the PyTorch forward."""
    B, C, H, W = x.shape
    p = patch_size
    row, col = H // p, W // p
    outs = []
    idx = 0
    for i in range(row):
        for j in range(col):
            patch = x[:, :, i * p:(i + 1) * p, j * p:(j + 1) * p].reshape(B, -1)
            outs.append(patch @ weights[idx] + biases[idx])
            idx += 1
    return jnp.stack(outs, axis=1)


if __name__ == "__main__":
    # Small shapes consistent with the module.
    batch = 2
    channel = 4
    img_size = 16
    patch_size = 8
    d_dim = 32
    n_patches = (img_size * img_size) // (patch_size * patch_size)   # 4
    K = channel * patch_size * patch_size                            # 256

    key = jax.random.PRNGKey(0)
    kx, kw, kb = jax.random.split(key, 3)

    x = jax.random.normal(kx, (batch, channel, img_size, img_size), dtype=jnp.float32)

    # Deterministic init mimicking nn.Linear's uniform(-1/sqrt(K), 1/sqrt(K)).
    bound = 1.0 / math.sqrt(K)
    weights = jax.random.uniform(kw, (n_patches, K, d_dim), jnp.float32, -bound, bound)
    biases = jax.random.uniform(kb, (n_patches, d_dim), jnp.float32, -bound, bound)

    fn = jax.jit(functools.partial(patch_embedding_pallas, patch_size=patch_size))
    out = fn(x, weights, biases)
    out = jax.block_until_ready(out)

    ref = _reference(x, weights, biases, patch_size)
    assert out.shape == (batch, n_patches, d_dim), out.shape
    # bf16 operands (f32 accumulation) -> loosened tolerance vs. the f32 reference.
    assert jnp.allclose(out, ref, atol=5e-2, rtol=5e-2), "mismatch vs reference"

    print("KERNEL_OK")
</pallas_src>

<mosaic_0001>
module attributes {stable_mosaic.version = 11 : i64} {
  func.func @_patch_embed_kernel(%arg0: memref<2x1024xbf16, #tpu.memory_space<vmem>>, %arg1: memref<1024x128xbf16, #tpu.memory_space<vmem>>, %arg2: memref<1x128xf32, #tpu.memory_space<vmem>>, %arg3: memref<2x128xf32, #tpu.memory_space<vmem>>) attributes {dimension_semantics = [], scalar_prefetch = 0 : i64, scratch_operands = 0 : i64, tpu.core_type = #tpu.core_type<tc>} {
    %c0 = arith.constant 0 : index
    %c0_0 = arith.constant 0 : index
    %0 = vector.load %arg0[%c0, %c0_0] : memref<2x1024xbf16, #tpu.memory_space<vmem>>, vector<2x1024xbf16>
    %c0_1 = arith.constant 0 : index
    %c0_2 = arith.constant 0 : index
    %1 = vector.load %arg1[%c0_1, %c0_2] : memref<1024x128xbf16, #tpu.memory_space<vmem>>, vector<1024x128xbf16>
    %cst = arith.constant dense<0.000000e+00> : vector<2x128xf32>
    %2 = tpu.matmul %0, %1, %cst {dimension_numbers = #tpu.dot_dimension_numbers<[1], [0], [0], [1], [0, 0, 1, 1], [], []>} : vector<2x1024xbf16>, vector<1024x128xbf16>, vector<2x128xf32> -> vector<2x128xf32>
    %c0_3 = arith.constant 0 : index
    %c0_4 = arith.constant 0 : index
    %3 = vector.load %arg2[%c0_3, %c0_4] : memref<1x128xf32, #tpu.memory_space<vmem>>, vector<1x128xf32>
    %4 = vector.broadcast %3 : vector<1x128xf32> to vector<2x128xf32>
    %5 = arith.addf %2, %4 : vector<2x128xf32>
    %c0_5 = arith.constant 0 : index
    %c0_6 = arith.constant 0 : index
    %6 = vector.load %arg3[%c0_5, %c0_6] : memref<2x128xf32, #tpu.memory_space<vmem>>, vector<2x128xf32>
    tpu.vector_store %arg3[%c0_5, %c0_6], %5 {strides = array<i32>} : memref<2x128xf32, #tpu.memory_space<vmem>>, vector<2x128xf32>,
    return
  }
}

</mosaic_0001>

<llo_original>
// kernel: patch_embedding_pallas.1
$region0: #{patch_embedding_pallas.1}
  #allocation0 [shape = 'u32[]', space=smem, size = 0x4, offset = 0x4, fixed_abs, tag = 'smem constant byte address 0x4 - core index']
  #allocation1 [shape = 'u32[144,128]{1,0:T(1,128)}', space=vmem, size = 0x12000, scoped, tag = 'internal scratch']
  %s0 = inlined_call_operand.vmem [shape: bf16[2,1024], index: 0, kind: input, shape index: {}]
  %s1 = inlined_call_operand.vmem [shape: bf16[1024,128], index: 1, kind: input, shape index: {}]
  %s2 = inlined_call_operand.vmem [shape: f32[1,128], index: 2, kind: input, shape index: {}]
  %s3 = inlined_call_operand.vmem [shape: f32[2,128], index: 3, kind: output, shape index: {}]
  %s4 = sld [smem:[#allocation0]]
  $region22: #{patch_embedding_pallas.1} parent=0
    _
  %s6 = ssub.s32 1, %s4
  %s7 = scalar_select 0, %s6, %s4
  // Predicated region
  $region2: #{patch_embedding_pallas.1} parent=0 // pred_check
    _
  $region3: #{patch_embedding_pallas.1} parent=0 // pred_check_branch
    %9 = sbr.rel (0) target = $region5
  $region4: #{patch_embedding_pallas.1} parent=0 // pred_region
    _
  $region5: #{patch_embedding_pallas.1} parent=0 // pred_fallthru
    _
  // Predicated region
  $region6: #{patch_embedding_pallas.1} parent=0 // pred_check
    _
  $region7: #{patch_embedding_pallas.1} parent=0 // pred_check_branch
    %11 = sbr.rel (0) target = $region9
  $region8: #{patch_embedding_pallas.1} parent=0 // pred_region
    _
  $region9: #{patch_embedding_pallas.1} parent=0 // pred_fallthru
    _
  // Predicated region
  $region10: #{patch_embedding_pallas.1} parent=0 // pred_check
    _
  $region11: #{patch_embedding_pallas.1} parent=0 // pred_check_branch
    %13 = sbr.rel (0) target = $region13
  $region12: #{patch_embedding_pallas.1} parent=0 // pred_region
    _
  $region13: #{patch_embedding_pallas.1} parent=0 // pred_fallthru
    _
  %v15 = vld [vmem:[%s0] sm:$0xff]
  %v16 = vld [vmem:[%s1] sm:$0xf]
  %v17 = vld [vmem:[%s1 + $0x4] sm:$0xf]
  %v18 = vld [vmem:[%s1 + $0x8] sm:$0xf]
  %v19 = vld [vmem:[%s1 + $0xc] sm:$0xf]
  %v20 = vld [vmem:[%s1 + $0x10] sm:$0xf]
  %v21 = vld [vmem:[%s1 + $0x14] sm:$0xf]
  %v22 = vld [vmem:[%s1 + $0x18] sm:$0xf]
  %v23 = vld [vmem:[%s1 + $0x1c] sm:$0xf]
  %v24 = vld [vmem:[%s1 + $0x20] sm:$0xf]
  %v25 = vld [vmem:[%s1 + $0x24] sm:$0xf]
  %v26 = vld [vmem:[%s1 + $0x28] sm:$0xf]
  %v27 = vld [vmem:[%s1 + $0x2c] sm:$0xf]
  %v28 = vld [vmem:[%s1 + $0x30] sm:$0xf]
  %v29 = vld [vmem:[%s1 + $0x34] sm:$0xf]
  %v30 = vld [vmem:[%s1 + $0x38] sm:$0xf]
  %v31 = vld [vmem:[%s1 + $0x3c] sm:$0xf]
  %v32 = vld [vmem:[%s1 + $0x40] sm:$0xf]
  %v33 = vld [vmem:[%s1 + $0x44] sm:$0xf]
  %v34 = vld [vmem:[%s1 + $0x48] sm:$0xf]
  %v35 = vld [vmem:[%s1 + $0x4c] sm:$0xf]
  %v36 = vld [vmem:[%s1 + $0x50] sm:$0xf]
  %v37 = vld [vmem:[%s1 + $0x54] sm:$0xf]
  %v38 = vld [vmem:[%s1 + $0x58] sm:$0xf]
  %v39 = vld [vmem:[%s1 + $0x5c] sm:$0xf]
  %v40 = vld [vmem:[%s1 + $0x60] sm:$0xf]
  %v41 = vld [vmem:[%s1 + $0x64] sm:$0xf]
  %v42 = vld [vmem:[%s1 + $0x68] sm:$0xf]
  %v43 = vld [vmem:[%s1 + $0x6c] sm:$0xf]
  %v44 = vld [vmem:[%s1 + $0x70] sm:$0xf]
  %v45 = vld [vmem:[%s1 + $0x74] sm:$0xf]
  %v46 = vld [vmem:[%s1 + $0x78] sm:$0xf]
  %v47 = vld [vmem:[%s1 + $0x7c] sm:$0xf]
  %v48 = vld [vmem:[%s1 + $0x80] sm:$0xf]
  %v49 = vld [vmem:[%s1 + $0x84] sm:$0xf]
  %v50 = vld [vmem:[%s1 + $0x88] sm:$0xf]
  %v51 = vld [vmem:[%s1 + $0x8c] sm:$0xf]
  %v52 = vld [vmem:[%s1 + $0x90] sm:$0xf]
  %v53 = vld [vmem:[%s1 + $0x94] sm:$0xf]
  %v54 = vld [vmem:[%s1 + $0x98] sm:$0xf]
  %v55 = vld [vmem:[%s1 + $0x9c] sm:$0xf]
  %v56 = vld [vmem:[%s1 + $0xa0] sm:$0xf]
  %v57 = vld [vmem:[%s1 + $0xa4] sm:$0xf]
  %v58 = vld [vmem:[%s1 + $0xa8] sm:$0xf]
  %v59 = vld [vmem:[%s1 + $0xac] sm:$0xf]
  %v60 = vld [vmem:[%s1 + $0xb0] sm:$0xf]
  %v61 = vld [vmem:[%s1 + $0xb4] sm:$0xf]
  %v62 = vld [vmem:[%s1 + $0xb8] sm:$0xf]
  %v63 = vld [vmem:[%s1 + $0xbc] sm:$0xf]
  %v64 = vld [vmem:[%s1 + $0xc0] sm:$0xf]
  %v65 = vld [vmem:[%s1 + $0xc4] sm:$0xf]
  %v66 = vld [vmem:[%s1 + $0xc8] sm:$0xf]
  %v67 = vld [vmem:[%s1 + $0xcc] sm:$0xf]
  %v68 = vld [vmem:[%s1 + $0xd0] sm:$0xf]
  %v69 = vld [vmem:[%s1 + $0xd4] sm:$0xf]
  %v70 = vld [vmem:[%s1 + $0xd8] sm:$0xf]
  %v71 = vld [vmem:[%s1 + $0xdc] sm:$0xf]
  %v72 = vld [vmem:[%s1 + $0xe0] sm:$0xf]
  %v73 = vld [vmem:[%s1 + $0xe4] sm:$0xf]
  %v74 = vld [vmem:[%s1 + $0xe8] sm:$0xf]
  %v75 = vld [vmem:[%s1 + $0xec] sm:$0xf]
  %v76 = vld [vmem:[%s1 + $0xf0] sm:$0xf]
  %v77 = vld [vmem:[%s1 + $0xf4] sm:$0xf]
  %v78 = vld [vmem:[%s1 + $0xf8] sm:$0xf]
  %v79 = vld [vmem:[%s1 + $0xfc] sm:$0xf]
  %v80 = vld [vmem:[%s1 + $0x100] sm:$0xf]
  %v81 = vld [vmem:[%s1 + $0x104] sm:$0xf]
  %v82 = vld [vmem:[%s1 + $0x108] sm:$0xf]
  %v83 = vld [vmem:[%s1 + $0x10c] sm:$0xf]
  %v84 = vld [vmem:[%s1 + $0x110] sm:$0xf]
  %v85 = vld [vmem:[%s1 + $0x114] sm:$0xf]
  %v86 = vld [vmem:[%s1 + $0x118] sm:$0xf]
  %v87 = vld [vmem:[%s1 + $0x11c] sm:$0xf]
  %v88 = vld [vmem:[%s1 + $0x120] sm:$0xf]
  %v89 = vld [vmem:[%s1 + $0x124] sm:$0xf]
  %v90 = vld [vmem:[%s1 + $0x128] sm:$0xf]
  %v91 = vld [vmem:[%s1 + $0x12c] sm:$0xf]
  %v92 = vld [vmem:[%s1 + $0x130] sm:$0xf]
  %v93 = vld [vmem:[%s1 + $0x134] sm:$0xf]
  %v94 = vld [vmem:[%s1 + $0x138] sm:$0xf]
  %v95 = vld [vmem:[%s1 + $0x13c] sm:$0xf]
  %v96 = vld [vmem:[%s1 + $0x140] sm:$0xf]
  %v97 = vld [vmem:[%s1 + $0x144] sm:$0xf]
  %v98 = vld [vmem:[%s1 + $0x148] sm:$0xf]
  %v99 = vld [vmem:[%s1 + $0x14c] sm:$0xf]
  %v100 = vld [vmem:[%s1 + $0x150] sm:$0xf]
  %v101 = vld [vmem:[%s1 + $0x154] sm:$0xf]
  %v102 = vld [vmem:[%s1 + $0x158] sm:$0xf]
  %v103 = vld [vmem:[%s1 + $0x15c] sm:$0xf]
  %v104 = vld [vmem:[%s1 + $0x160] sm:$0xf]
  %v105 = vld [vmem:[%s1 + $0x164] sm:$0xf]
  %v106 = vld [vmem:[%s1 + $0x168] sm:$0xf]
  %v107 = vld [vmem:[%s1 + $0x16c] sm:$0xf]
  %v108 = vld [vmem:[%s1 + $0x170] sm:$0xf]
  %v109 = vld [vmem:[%s1 + $0x174] sm:$0xf]
  %v110 = vld [vmem:[%s1 + $0x178] sm:$0xf]
  %v111 = vld [vmem:[%s1 + $0x17c] sm:$0xf]
  %v112 = vld [vmem:[%s1 + $0x180] sm:$0xf]
  %v113 = vld [vmem:[%s1 + $0x184] sm:$0xf]
  %v114 = vld [vmem:[%s1 + $0x188] sm:$0xf]
  %v115 = vld [vmem:[%s1 + $0x18c] sm:$0xf]
  %v116 = vld [vmem:[%s1 + $0x190] sm:$0xf]
  %v117 = vld [vmem:[%s1 + $0x194] sm:$0xf]
  %v118 = vld [vmem:[%s1 + $0x198] sm:$0xf]
  %v119 = vld [vmem:[%s1 + $0x19c] sm:$0xf]
  %v120 = vld [vmem:[%s1 + $0x1a0] sm:$0xf]
  %v121 = vld [vmem:[%s1 + $0x1a4] sm:$0xf]
  %v122 = vld [vmem:[%s1 + $0x1a8] sm:$0xf]
  %v123 = vld [vmem:[%s1 + $0x1ac] sm:$0xf]
  %v124 = vld [vmem:[%s1 + $0x1b0] sm:$0xf]
  %v125 = vld [vmem:[%s1 + $0x1b4] sm:$0xf]
  %v126 = vld [vmem:[%s1 + $0x1b8] sm:$0xf]
  %v127 = vld [vmem:[%s1 + $0x1bc] sm:$0xf]
  %v128 = vld [vmem:[%s1 + $0x1c0] sm:$0xf]
  %v129 = vld [vmem:[%s1 + $0x1c4] sm:$0xf]
  %v130 = vld [vmem:[%s1 + $0x1c8] sm:$0xf]
  %v131 = vld [vmem:[%s1 + $0x1cc] sm:$0xf]
  %v132 = vld [vmem:[%s1 + $0x1d0] sm:$0xf]
  %v133 = vld [vmem:[%s1 + $0x1d4] sm:$0xf]
  %v134 = vld [vmem:[%s1 + $0x1d8] sm:$0xf]
  %v135 = vld [vmem:[%s1 + $0x1dc] sm:$0xf]
  %v136 = vld [vmem:[%s1 + $0x1e0] sm:$0xf]
  %v137 = vld [vmem:[%s1 + $0x1e4] sm:$0xf]
  %v138 = vld [vmem:[%s1 + $0x1e8] sm:$0xf]
  %v139 = vld [vmem:[%s1 + $0x1ec] sm:$0xf]
  %v140 = vld [vmem:[%s1 + $0x1f0] sm:$0xf]
  %v141 = vld [vmem:[%s1 + $0x1f4] sm:$0xf]
  %v142 = vld [vmem:[%s1 + $0x1f8] sm:$0xf]
  %v143 = vld [vmem:[%s1 + $0x1fc] sm:$0xf]
  %v144 = vld [vmem:[%s2] sm:$0x1]
  %v146 = vlaneseq
  %v147 = vshrl.u32 %v146, 7
  %v148 = vsub.s32 0, %v147
  %v149 = vrot.slane %v144, %v148
  %v152 = vcombine.high %v15, %v15
  %v154 = vunpack.c.l.s4 1966171168
  %v155 = vunpack.c.0.s8 %v154
  %v156 = vlaneseq
  %v157 = vshrl.u32 %v156, 7
  %v158 = vsub.s32 %v155, %v157
  %v159 = vrot.slane %v15, %v158
  %v161 = vunpack.c.l.s4 1966171168
  %v162 = vunpack.c.0.s8 %v161
  %v163 = vlaneseq
  %v164 = vshrl.u32 %v163, 7
  %v165 = vsub.s32 %v162, %v164
  %v166 = vrot.slane %v152, %v165
  %v167 = vcombine.high %v159, %v159
  %v168 = vcombine.high %v166, %v166
  %v170 = vunpack.c.l.s4 1966171168
  %v171 = vunpack.c.0.s8 %v170
  %v172 = vlaneseq
  %v173 = vshrl.u32 %v172, 7
  %v174 = vsub.s32 %v171, %v173
  %v175 = vrot.slane %v159, %v174
  %v177 = vunpack.c.l.s4 1966171168
  %v178 = vunpack.c.0.s8 %v177
  %v179 = vlaneseq
  %v180 = vshrl.u32 %v179, 7
  %v181 = vsub.s32 %v178, %v180
  %v182 = vrot.slane %v166, %v181
  %v184 = vunpack.c.l.s4 1966171168
  %v185 = vunpack.c.0.s8 %v184
  %v186 = vlaneseq
  %v187 = vshrl.u32 %v186, 7
  %v188 = vsub.s32 %v185, %v187
  %v189 = vrot.slane %v167, %v188
  %v191 = vunpack.c.l.s4 1966171168
  %v192 = vunpack.c.0.s8 %v191
  %v193 = vlaneseq
  %v194 = vshrl.u32 %v193, 7
  %v195 = vsub.s32 %v192, %v194
  %v196 = vrot.slane %v168, %v195
  %v197 = vcombine.high %v175, %v175
  %v198 = vcombine.high %v182, %v182
  %v199 = vcombine.high %v189, %v189
  %v200 = vcombine.high %v196, %v196
  %v337 = vunpack.c.l.b16 %v16
  %v338 = vunpack.c.l.b16 %v17
  %v339 = vunpack.c.l.b16 %v18
  %v340 = vunpack.c.l.b16 %v19
  %v341 = vunpack.c.l.b16 %v20
  %v342 = vunpack.c.l.b16 %v21
  %v343 = vunpack.c.l.b16 %v22
  %v344 = vunpack.c.l.b16 %v23
  %v345 = vunpack.c.l.b16 %v24
  %v346 = vunpack.c.l.b16 %v25
  %v347 = vunpack.c.l.b16 %v26
  %v348 = vunpack.c.l.b16 %v27
  %v349 = vunpack.c.l.b16 %v28
  %v350 = vunpack.c.l.b16 %v29
  %v351 = vunpack.c.l.b16 %v30
  %v352 = vunpack.c.l.b16 %v31
  %v353 = vunpack.c.l.b16 %v32
  %v354 = vunpack.c.l.b16 %v33
  %v355 = vunpack.c.l.b16 %v34
  %v356 = vunpack.c.l.b16 %v35
  %v357 = vunpack.c.l.b16 %v36
  %v358 = vunpack.c.l.b16 %v37
  %v359 = vunpack.c.l.b16 %v38
  %v360 = vunpack.c.l.b16 %v39
  %v361 = vunpack.c.l.b16 %v40
  %v362 = vunpack.c.l.b16 %v41
  %v363 = vunpack.c.l.b16 %v42
  %v364 = vunpack.c.l.b16 %v43
  %v365 = vunpack.c.l.b16 %v44
  %v366 = vunpack.c.l.b16 %v45
  %v367 = vunpack.c.l.b16 %v46
  %v368 = vunpack.c.l.b16 %v47
  %v369 = vunpack.c.l.b16 %v48
  %v370 = vunpack.c.l.b16 %v49
  %v371 = vunpack.c.l.b16 %v50
  %v372 = vunpack.c.l.b16 %v51
  %v373 = vunpack.c.l.b16 %v52
  %v374 = vunpack.c.l.b16 %v53
  %v375 = vunpack.c.l.b16 %v54
  %v376 = vunpack.c.l.b16 %v55
  %v377 = vunpack.c.l.b16 %v56
  %v378 = vunpack.c.l.b16 %v57
  %v379 = vunpack.c.l.b16 %v58
  %v380 = vunpack.c.l.b16 %v59
  %v381 = vunpack.c.l.b16 %v60
  %v382 = vunpack.c.l.b16 %v61
  %v383 = vunpack.c.l.b16 %v62
  %v384 = vunpack.c.l.b16 %v63
  %v385 = vunpack.c.l.b16 %v64
  %v386 = vunpack.c.l.b16 %v65
  %v387 = vunpack.c.l.b16 %v66
  %v388 = vunpack.c.l.b16 %v67
  %v389 = vunpack.c.l.b16 %v68
  %v390 = vunpack.c.l.b16 %v69
  %v391 = vunpack.c.l.b16 %v70
  %v392 = vunpack.c.l.b16 %v71
  %v393 = vunpack.c.l.b16 %v72
  %v394 = vunpack.c.l.b16 %v73
  %v395 = vunpack.c.l.b16 %v74
  %v396 = vunpack.c.l.b16 %v75
  %v397 = vunpack.c.l.b16 %v76
  %v398 = vunpack.c.l.b16 %v77
  %v399 = vunpack.c.l.b16 %v78
  %v400 = vunpack.c.l.b16 %v79
  %v401 = vunpack.c.l.b16 %v80
  %v402 = vunpack.c.l.b16 %v81
  %v403 = vunpack.c.l.b16 %v82
  %v404 = vunpack.c.l.b16 %v83
  %v405 = vunpack.c.l.b16 %v84
  %v406 = vunpack.c.l.b16 %v85
  %v407 = vunpack.c.l.b16 %v86
  %v408 = vunpack.c.l.b16 %v87
  %v409 = vunpack.c.l.b16 %v88
  %v410 = vunpack.c.l.b16 %v89
  %v411 = vunpack.c.l.b16 %v90
  %v412 = vunpack.c.l.b16 %v91
  %v413 = vunpack.c.l.b16 %v92
  %v414 = vunpack.c.l.b16 %v93
  %v415 = vunpack.c.l.b16 %v94
  %v416 = vunpack.c.l.b16 %v95
  %v417 = vunpack.c.l.b16 %v96
  %v418 = vunpack.c.l.b16 %v97
  %v419 = vunpack.c.l.b16 %v98
  %v420 = vunpack.c.l.b16 %v99
  %v421 = vunpack.c.l.b16 %v100
  %v422 = vunpack.c.l.b16 %v101
  %v423 = vunpack.c.l.b16 %v102
  %v424 = vunpack.c.l.b16 %v103
  %v425 = vunpack.c.l.b16 %v104
  %v426 = vunpack.c.l.b16 %v105
  %v427 = vunpack.c.l.b16 %v106
  %v428 = vunpack.c.l.b16 %v107
  %v429 = vunpack.c.l.b16 %v108
  %v430 = vunpack.c.l.b16 %v109
  %v431 = vunpack.c.l.b16 %v110
  %v432 = vunpack.c.l.b16 %v111
  %v433 = vunpack.c.l.b16 %v112
  %v434 = vunpack.c.l.b16 %v113
  %v435 = vunpack.c.l.b16 %v114
  %v436 = vunpack.c.l.b16 %v115
  %v437 = vunpack.c.l.b16 %v116
  %v438 = vunpack.c.l.b16 %v117
  %v439 = vunpack.c.l.b16 %v118
  %v440 = vunpack.c.l.b16 %v119
  %v441 = vunpack.c.l.b16 %v120
  %v442 = vunpack.c.l.b16 %v121
  %v443 = vunpack.c.l.b16 %v122
  %v444 = vunpack.c.l.b16 %v123
  %v445 = vunpack.c.l.b16 %v124
  %v446 = vunpack.c.l.b16 %v125
  %v447 = vunpack.c.l.b16 %v126
  %v448 = vunpack.c.l.b16 %v127
  %v449 = vunpack.c.l.b16 %v128
  %v450 = vunpack.c.l.b16 %v129
  %v451 = vunpack.c.l.b16 %v130
  %v452 = vunpack.c.l.b16 %v131
  %v453 = vunpack.c.l.b16 %v132
  %v454 = vunpack.c.l.b16 %v133
  %v455 = vunpack.c.l.b16 %v134
  %v456 = vunpack.c.l.b16 %v135
  %v457 = vunpack.c.l.b16 %v136
  %v458 = vunpack.c.l.b16 %v137
  %v459 = vunpack.c.l.b16 %v138
  %v460 = vunpack.c.l.b16 %v139
  %v461 = vunpack.c.l.b16 %v140
  %v462 = vunpack.c.l.b16 %v141
  %v463 = vunpack.c.l.b16 %v142
  %v464 = vunpack.c.l.b16 %v143
  %v465 = vpack.c.b16 %v338, %v337
  %v466 = vpack.c.b16 %v340, %v339
  %v467 = vpack.c.b16 %v342, %v341
  %v468 = vpack.c.b16 %v344, %v343
  %v469 = vpack.c.b16 %v346, %v345
  %v470 = vpack.c.b16 %v348, %v347
  %v471 = vpack.c.b16 %v350, %v349
  %v472 = vpack.c.b16 %v352, %v351
  %v473 = vpack.c.b16 %v354, %v353
  %v474 = vpack.c.b16 %v356, %v355
  %v475 = vpack.c.b16 %v358, %v357
  %v476 = vpack.c.b16 %v360, %v359
  %v477 = vpack.c.b16 %v362, %v361
  %v478 = vpack.c.b16 %v364, %v363
  %v479 = vpack.c.b16 %v366, %v365
  %v480 = vpack.c.b16 %v368, %v367
  %v481 = vpack.c.b16 %v370, %v369
  %v482 = vpack.c.b16 %v372, %v371
  %v483 = vpack.c.b16 %v374, %v373
  %v484 = vpack.c.b16 %v376, %v375
  %v485 = vpack.c.b16 %v378, %v377
  %v486 = vpack.c.b16 %v380, %v379
  %v487 = vpack.c.b16 %v382, %v381
  %v488 = vpack.c.b16 %v384, %v383
  %v489 = vpack.c.b16 %v386, %v385
  %v490 = vpack.c.b16 %v388, %v387
  %v491 = vpack.c.b16 %v390, %v389
  %v492 = vpack.c.b16 %v392, %v391
  %v493 = vpack.c.b16 %v394, %v393
  %v494 = vpack.c.b16 %v396, %v395
  %v495 = vpack.c.b16 %v398, %v397
  %v496 = vpack.c.b16 %v400, %v399
  %v497 = vpack.c.b16 %v402, %v401
  %v498 = vpack.c.b16 %v404, %v403
  %v499 = vpack.c.b16 %v406, %v405
  %v500 = vpack.c.b16 %v408, %v407
  %v501 = vpack.c.b16 %v410, %v409
  %v502 = vpack.c.b16 %v412, %v411
  %v503 = vpack.c.b16 %v414, %v413
  %v504 = vpack.c.b16 %v416, %v415
  %v505 = vpack.c.b16 %v418, %v417
  %v506 = vpack.c.b16 %v420, %v419
  %v507 = vpack.c.b16 %v422, %v421
  %v508 = vpack.c.b16 %v424, %v423
  %v509 = vpack.c.b16 %v426, %v425
  %v510 = vpack.c.b16 %v428, %v427
  %v511 = vpack.c.b16 %v430, %v429
  %v512 = vpack.c.b16 %v432, %v431
  %v513 = vpack.c.b16 %v434, %v433
  %v514 = vpack.c.b16 %v436, %v435
  %v515 = vpack.c.b16 %v438, %v437
  %v516 = vpack.c.b16 %v440, %v439
  %v517 = vpack.c.b16 %v442, %v441
  %v518 = vpack.c.b16 %v444, %v443
  %v519 = vpack.c.b16 %v446, %v445
  %v520 = vpack.c.b16 %v448, %v447
  %v521 = vpack.c.b16 %v450, %v449
  %v522 = vpack.c.b16 %v452, %v451
  %v523 = vpack.c.b16 %v454, %v453
  %v524 = vpack.c.b16 %v456, %v455
  %v525 = vpack.c.b16 %v458, %v457
  %v526 = vpack.c.b16 %v460, %v459
  %v527 = vpack.c.b16 %v462, %v461
  %v528 = vpack.c.b16 %v464, %v463
  %593 = vmatprep.subr.bf16.mxu0 0
  %594 = vmatpush1.bf16.msra.mxu0 %v465
  %595 = vmatprep.subr.bf16.mxu0 0
  %596 = vmatpush1.bf16.msra.mxu0 %v466
  %597 = vmatprep.subr.bf16.mxu0 0
  %598 = vmatpush1.bf16.msra.mxu0 %v467
  %599 = vmatprep.subr.bf16.mxu0 0
  %600 = vmatpush1.bf16.msra.mxu0 %v468
  %601 = vmatprep.subr.bf16.mxu0 0
  %602 = vmatpush1.bf16.msra.mxu0 %v469
  %603 = vmatprep.subr.bf16.mxu0 0
  %604 = vmatpush1.bf16.msra.mxu0 %v470
  %605 = vmatprep.subr.bf16.mxu0 0
  %606 = vmatpush1.bf16.msra.mxu0 %v471
  %607 = vmatprep.subr.bf16.mxu0 0
  %608 = vmatpush1.bf16.msra.mxu0 %v472
  %609 = vmatprep.subr.bf16.mxu0 0
  %610 = vmatpush1.bf16.msra.mxu0 %v473
  %611 = vmatprep.subr.bf16.mxu0 0
  %612 = vmatpush1.bf16.msra.mxu0 %v474
  %613 = vmatprep.subr.bf16.mxu0 0
  %614 = vmatpush1.bf16.msra.mxu0 %v475
  %615 = vmatprep.subr.bf16.mxu0 0
  %616 = vmatpush1.bf16.msra.mxu0 %v476
  %617 = vmatprep.subr.bf16.mxu0 0
  %618 = vmatpush1.bf16.msra.mxu0 %v477
  %619 = vmatprep.subr.bf16.mxu0 0
  %620 = vmatpush1.bf16.msra.mxu0 %v478
  %621 = vmatprep.subr.bf16.mxu0 0
  %622 = vmatpush1.bf16.msra.mxu0 %v479
  %623 = vmatprep.subr.bf16.mxu0 0
  %624 = vmatpush1.bf16.msra.mxu0 %v480
  %625 = vmatprep.mubr.bf16.mxu0 %v189
  %626 = vmatmul.mubr.bf16.gmra.mrb[0].mxu0 %v175
  %v627 = vpop.f32.mrb[0].mxu0
  %v628 = vadd.f32 %v149, %v627
  %v629 = vpop.f32.mrb[0].mxu0
  %v630 = vpop.f32.mrb[0].mxu0
  %v631 = vpop.f32.mrb[0].mxu0
  %632 = vdwg.mxu0
  %633 = vmatprep.subr.bf16.mxu0 0
  %634 = vmatpush1.bf16.msra.mxu0 %v481
  %635 = vmatprep.subr.bf16.mxu0 0
  %636 = vmatpush1.bf16.msra.mxu0 %v482
  %637 = vmatprep.subr.bf16.mxu0 0
  %638 = vmatpush1.bf16.msra.mxu0 %v483
  %639 = vmatprep.subr.bf16.mxu0 0
  %640 = vmatpush1.bf16.msra.mxu0 %v484
  %641 = vmatprep.subr.bf16.mxu0 0
  %642 = vmatpush1.bf16.msra.mxu0 %v485
  %643 = vmatprep.subr.bf16.mxu0 0
  %644 = vmatpush1.bf16.msra.mxu0 %v486
  %645 = vmatprep.subr.bf16.mxu0 0
  %646 = vmatpush1.bf16.msra.mxu0 %v487
  %647 = vmatprep.subr.bf16.mxu0 0
  %648 = vmatpush1.bf16.msra.mxu0 %v488
  %649 = vmatprep.subr.bf16.mxu0 0
  %650 = vmatpush1.bf16.msra.mxu0 %v489
  %651 = vmatprep.subr.bf16.mxu0 0
  %652 = vmatpush1.bf16.msra.mxu0 %v490
  %653 = vmatprep.subr.bf16.mxu0 0
  %654 = vmatpush1.bf16.msra.mxu0 %v491
  %655 = vmatprep.subr.bf16.mxu0 0
  %656 = vmatpush1.bf16.msra.mxu0 %v492
  %657 = vmatprep.subr.bf16.mxu0 0
  %658 = vmatpush1.bf16.msra.mxu0 %v493
  %659 = vmatprep.subr.bf16.mxu0 0
  %660 = vmatpush1.bf16.msra.mxu0 %v494
  %661 = vmatprep.subr.bf16.mxu0 0
  %662 = vmatpush1.bf16.msra.mxu0 %v495
  %663 = vmatprep.subr.bf16.mxu0 0
  %664 = vmatpush1.bf16.msra.mxu0 %v496
  %665 = vmatprep.mubr.bf16.mxu0 %v199
  %666 = vmatmul.mubr.bf16.gmra.mrb[0].mxu0 %v197
  %v667 = vpop.f32.mrb[0].mxu0
  %v668 = vadd.f32 %v628, %v667
  %v669 = vpop.f32.mrb[0].mxu0
  %v670 = vpop.f32.mrb[0].mxu0
  %v671 = vpop.f32.mrb[0].mxu0
  %672 = vdwg.mxu0
  %673 = vmatprep.subr.bf16.mxu0 0
  %674 = vmatpush1.bf16.msra.mxu0 %v497
  %675 = vmatprep.subr.bf16.mxu0 0
  %676 = vmatpush1.bf16.msra.mxu0 %v498
  %677 = vmatprep.subr.bf16.mxu0 0
  %678 = vmatpush1.bf16.msra.mxu0 %v499
  %679 = vmatprep.subr.bf16.mxu0 0
  %680 = vmatpush1.bf16.msra.mxu0 %v500
  %681 = vmatprep.subr.bf16.mxu0 0
  %682 = vmatpush1.bf16.msra.mxu0 %v501
  %683 = vmatprep.subr.bf16.mxu0 0
  %684 = vmatpush1.bf16.msra.mxu0 %v502
  %685 = vmatprep.subr.bf16.mxu0 0
  %686 = vmatpush1.bf16.msra.mxu0 %v503
  %687 = vmatprep.subr.bf16.mxu0 0
  %688 = vmatpush1.bf16.msra.mxu0 %v504
  %689 = vmatprep.subr.bf16.mxu0 0
  %690 = vmatpush1.bf16.msra.mxu0 %v505
  %691 = vmatprep.subr.bf16.mxu0 0
  %692 = vmatpush1.bf16.msra.mxu0 %v506
  %693 = vmatprep.subr.bf16.mxu0 0
  %694 = vmatpush1.bf16.msra.mxu0 %v507
  %695 = vmatprep.subr.bf16.mxu0 0
  %696 = vmatpush1.bf16.msra.mxu0 %v508
  %697 = vmatprep.subr.bf16.mxu0 0
  %698 = vmatpush1.bf16.msra.mxu0 %v509
  %699 = vmatprep.subr.bf16.mxu0 0
  %700 = vmatpush1.bf16.msra.mxu0 %v510
  %701 = vmatprep.subr.bf16.mxu0 0
  %702 = vmatpush1.bf16.msra.mxu0 %v511
  %703 = vmatprep.subr.bf16.mxu0 0
  %704 = vmatpush1.bf16.msra.mxu0 %v512
  %705 = vmatprep.mubr.bf16.mxu0 %v196
  %706 = vmatmul.mubr.bf16.gmra.mrb[0].mxu0 %v182
  %v707 = vpop.f32.mrb[0].mxu0
  %v708 = vadd.f32 %v668, %v707
  %v709 = vpop.f32.mrb[0].mxu0
  %v710 = vpop.f32.mrb[0].mxu0
  %v711 = vpop.f32.mrb[0].mxu0
  %712 = vdwg.mxu0
  %713 = vmatprep.subr.bf16.mxu0 0
  %714 = vmatpush1.bf16.msra.mxu0 %v513
  %715 = vmatprep.subr.bf16.mxu0 0
  %716 = vmatpush1.bf16.msra.mxu0 %v514
  %717 = vmatprep.subr.bf16.mxu0 0
  %718 = vmatpush1.bf16.msra.mxu0 %v515
  %719 = vmatprep.subr.bf16.mxu0 0
  %720 = vmatpush1.bf16.msra.mxu0 %v516
  %721 = vmatprep.subr.bf16.mxu0 0
  %722 = vmatpush1.bf16.msra.mxu0 %v517
  %723 = vmatprep.subr.bf16.mxu0 0
  %724 = vmatpush1.bf16.msra.mxu0 %v518
  %725 = vmatprep.subr.bf16.mxu0 0
  %726 = vmatpush1.bf16.msra.mxu0 %v519
  %727 = vmatprep.subr.bf16.mxu0 0
  %728 = vmatpush1.bf16.msra.mxu0 %v520
  %729 = vmatprep.subr.bf16.mxu0 0
  %730 = vmatpush1.bf16.msra.mxu0 %v521
  %731 = vmatprep.subr.bf16.mxu0 0
  %732 = vmatpush1.bf16.msra.mxu0 %v522
  %733 = vmatprep.subr.bf16.mxu0 0
  %734 = vmatpush1.bf16.msra.mxu0 %v523
  %735 = vmatprep.subr.bf16.mxu0 0
  %736 = vmatpush1.bf16.msra.mxu0 %v524
  %737 = vmatprep.subr.bf16.mxu0 0
  %738 = vmatpush1.bf16.msra.mxu0 %v525
  %739 = vmatprep.subr.bf16.mxu0 0
  %740 = vmatpush1.bf16.msra.mxu0 %v526
  %741 = vmatprep.subr.bf16.mxu0 0
  %742 = vmatpush1.bf16.msra.mxu0 %v527
  %743 = vmatprep.subr.bf16.mxu0 0
  %744 = vmatpush1.bf16.msra.mxu0 %v528
  %745 = vmatprep.mubr.bf16.mxu0 %v200
  %746 = vmatmul.mubr.bf16.gmra.mrb[0].mxu0 %v198
  %v747 = vpop.f32.mrb[0].mxu0
  %v748 = vadd.f32 %v708, %v747
  %v749 = vpop.f32.mrb[0].mxu0
  %v750 = vpop.f32.mrb[0].mxu0
  %v751 = vpop.f32.mrb[0].mxu0
  %752 = vdwg.mxu0
  %753 = vst [vmem:[%s3] sm:$0x3] %v748
  // Predicated region
  $region14: #{patch_embedding_pallas.1} parent=0 // pred_check
    _
  $region15: #{patch_embedding_pallas.1} parent=0 // pred_check_branch
    %755 = sbr.rel (0) target = $region17
  $region16: #{patch_embedding_pallas.1} parent=0 // pred_region
    _
  $region17: #{patch_embedding_pallas.1} parent=0 // pred_fallthru
    _
  // Predicated region
  $region18: #{patch_embedding_pallas.1} parent=0 // pred_check
    _
  $region19: #{patch_embedding_pallas.1} parent=0 // pred_check_branch
    %757 = sbr.rel (0) target = $region21
  $region20: #{patch_embedding_pallas.1} parent=0 // pred_region
    _
  $region21: #{patch_embedding_pallas.1} parent=0 // pred_fallthru
    _

</llo_original>
